<compile_context>
chip_gen: v5e
topology: v5e:2x2
jax: 0.10.0
libtpu: 0.0.40
codegen_flags: <defaults>
</compile_context>

<pallas_src>
import functools

import jax
import jax.numpy as jnp
from jax.experimental import pallas as pl
from jax.experimental.pallas import tpu as pltpu


def _round_up(x, m):
    return ((x + m - 1) // m) * m


def _apply_nonlinearity(h, non_linearity, negative_slope):
    # Trace-time branch: resolved once per compile.
    if non_linearity == "leaky_relu":
        return jnp.where(h >= 0.0, h, negative_slope * h)
    if non_linearity == "tanh":
        return jnp.tanh(h)
    # 'relu' and any unknown value fall back to ReLU (matches the module).
    return jnp.maximum(h, 0.0)


def _ffn_compr_kernel(x_ref, state_ref, w1_ref, b1_ref, w2_ref, b2_ref,
                      out_ref, state_out_ref, *, non_linearity, negative_slope):
    # net1(x) + state : bf16 operands on the MXU, fp32 accumulation.
    h = jnp.dot(x_ref[...], w1_ref[...], preferred_element_type=jnp.float32)
    h = h + b1_ref[...] + state_ref[...].astype(jnp.float32)
    # net2 = non-linearity (fp32 on the VPU / EUP)
    h = _apply_nonlinearity(h, non_linearity, negative_slope)
    # new compression state (lane-dense store, H is a multiple of 128)
    state_out_ref[...] = h.astype(state_out_ref.dtype)
    # net3 : cast the activation back to the weight dtype for the MXU.
    out = jnp.dot(h.astype(w2_ref.dtype), w2_ref[...],
                  preferred_element_type=jnp.float32) + b2_ref[...]
    # net4 = Identity (dropout=None)
    out_ref[...] = out.astype(out_ref.dtype)


@functools.partial(
    jax.jit,
    static_argnames=("tile_n", "compute_dtype", "non_linearity", "negative_slope"))
def feedforward_with_compression_state(x, state, w1, b1, w2, b2, *,
                                       tile_n=None,
                                       compute_dtype=jnp.bfloat16,
                                       non_linearity="relu",
                                       negative_slope=0.01):
    """x: [B, T, D], state: [B, T, H] -> (out [B, T, D], new_state [B, T, H]).

    Weights are stored pre-transposed as [in, out]. Matmul operands are cast
    to `compute_dtype` (bf16 by default) with fp32 accumulation; pass
    compute_dtype=jnp.float32 for bit-faithful fp32 semantics.
    """
    B, T, D = x.shape
    H = state.shape[-1]
    N = B * T
    cdt = compute_dtype
    out_dtype = x.dtype

    # ---- lane / sublane alignment -------------------------------------
    Dp = _round_up(D, 128)          # lanes
    Hp = _round_up(H, 128)

    if tile_n is None:
        tile_n = 512 if N >= 512 else _round_up(N, 16)
    tile_n = max(16, _round_up(int(tile_n), 16))     # bf16 sublane packing
    Np = _round_up(N, tile_n)

    # ---- pad + cast inputs (zeros in padded K-rows keep matmuls exact) --
    x2 = jnp.zeros((Np, Dp), cdt).at[:N, :D].set(x.reshape(N, D).astype(cdt))
    s2 = jnp.zeros((Np, Hp), cdt).at[:N, :H].set(state.reshape(N, H).astype(cdt))
    w1p = jnp.zeros((Dp, Hp), cdt).at[:D, :H].set(w1.astype(cdt))
    w2p = jnp.zeros((Hp, Dp), cdt).at[:H, :D].set(w2.astype(cdt))
    b1p = jnp.zeros((1, Hp), jnp.float32).at[0, :H].set(b1.astype(jnp.float32))
    b2p = jnp.zeros((1, Dp), jnp.float32).at[0, :D].set(b2.astype(jnp.float32))

    # ---- VMEM budget (explicit limit; valid on v5e/v6e/v7x) -------------
    cbytes = jnp.dtype(cdt).itemsize
    obytes = jnp.dtype(out_dtype).itemsize
    tile_in_bytes = tile_n * (Dp + Hp) * cbytes          # x + state tile
    tile_out_bytes = tile_n * (Dp + Hp) * obytes         # out + new_state tile
    weight_bytes = 2 * Dp * Hp * cbytes + (Dp + Hp) * 4  # W1, W2, b1, b2
    vmem_need = 2 * (tile_in_bytes + tile_out_bytes) + 2 * weight_bytes
    vmem_limit = int(min(max(2 * vmem_need, 32 << 20), 64 << 20))

    grid = (Np // tile_n,)
    cost = pl.CostEstimate(
        flops=4 * Np * Dp * Hp,
        transcendentals=(Np * Hp) if non_linearity == "tanh" else 0,
        bytes_accessed=int(Np * (Dp + Hp) * (cbytes + obytes) + weight_bytes),
    )

    kernel = functools.partial(_ffn_compr_kernel,
                               non_linearity=non_linearity,
                               negative_slope=negative_slope)

    out, new_state = pl.pallas_call(
        kernel,
        out_shape=(
            jax.ShapeDtypeStruct((Np, Dp), out_dtype),
            jax.ShapeDtypeStruct((Np, Hp), out_dtype),
        ),
        grid_spec=pltpu.PrefetchScalarGridSpec(
            num_scalar_prefetch=0,
            grid=grid,
            in_specs=[
                pl.BlockSpec((tile_n, Dp), lambda i: (i, 0)),   # x rows
                pl.BlockSpec((tile_n, Hp), lambda i: (i, 0)),   # state rows
                pl.BlockSpec((Dp, Hp),     lambda i: (0, 0)),   # W1 (resident)
                pl.BlockSpec((1, Hp),      lambda i: (0, 0)),   # b1
                pl.BlockSpec((Hp, Dp),     lambda i: (0, 0)),   # W2 (resident)
                pl.BlockSpec((1, Dp),      lambda i: (0, 0)),   # b2
            ],
            out_specs=[
                pl.BlockSpec((tile_n, Dp), lambda i: (i, 0)),   # out rows
                pl.BlockSpec((tile_n, Hp), lambda i: (i, 0)),   # new state rows
            ],
        ),
        compiler_params=pltpu.CompilerParams(
            dimension_semantics=("parallel",),     # megacore-shardable on v7x
            vmem_limit_bytes=vmem_limit),
        cost_estimate=cost,
    )(x2, s2, w1p, b1p, w2p, b2p)

    out = out[:N, :D].reshape(B, T, D)
    new_state = new_state[:N, :H].reshape(B, T, H)
    return out, new_state


def _reference(x, state, w1, b1, w2, b2, compute_dtype=jnp.bfloat16,
               non_linearity="relu", negative_slope=0.01):
    """Mirrors the kernel's bf16-operand / fp32-accumulate numerics."""
    cdt = compute_dtype
    h = jnp.einsum("btd,dh->bth", x.astype(cdt), w1.astype(cdt),
                   preferred_element_type=jnp.float32)
    h = h + b1 + state.astype(cdt).astype(jnp.float32)
    h = _apply_nonlinearity(h, non_linearity, negative_slope)
    out = jnp.einsum("bth,hd->btd", h.astype(cdt), w2.astype(cdt),
                     preferred_element_type=jnp.float32) + b2
    return out.astype(x.dtype), h.astype(x.dtype)


if __name__ == "__main__":
    # Small deterministic config; exercises feature padding (96 -> 128 lanes)
    # and a multi-step grid (N=48 rows -> padded to 64 -> 2 grid steps @ 32).
    B, T = 2, 24
    input_size = 96
    hidden_size = input_size * 4        # 384 (PyTorch default when hidden_size is None)

    key = jax.random.PRNGKey(0)
    kx, ks, kw1, kb1, kw2, kb2 = jax.random.split(key, 6)

    x = jax.random.normal(kx, (B, T, input_size), dtype=jnp.float32)
    state = jax.random.normal(ks, (B, T, hidden_size), dtype=jnp.float32)

    # nn.Linear-equivalent params, stored pre-transposed as [in, out].
    w1 = jax.random.normal(kw1, (input_size, hidden_size), jnp.float32) / jnp.sqrt(input_size)
    b1 = jax.random.normal(kb1, (hidden_size,), jnp.float32) * 0.02
    w2 = jax.random.normal(kw2, (hidden_size, input_size), jnp.float32) / jnp.sqrt(hidden_size)
    b2 = jax.random.normal(kb2, (input_size,), jnp.float32) * 0.02

    ok = True
    for nl in ("relu", "tanh"):
        out, new_state = feedforward_with_compression_state(
            x, state, w1, b1, w2, b2, tile_n=32, non_linearity=nl)
        jax.block_until_ready((out, new_state))
        ref_out, ref_state = _reference(x, state, w1, b1, w2, b2, non_linearity=nl)
        ok &= bool(jnp.allclose(out, ref_out, atol=1e-2, rtol=1e-2))
        ok &= bool(jnp.allclose(new_state, ref_state, atol=1e-2, rtol=1e-2))

    assert ok, "kernel/reference mismatch"
    print("KERNEL_OK")
</pallas_src>

<mosaic_0001>
module attributes {stable_mosaic.version = 11 : i64} {
  func.func @_ffn_compr_kernel(%arg0: i32, %arg1: memref<32x128xbf16, #tpu.memory_space<vmem>>, %arg2: memref<32x384xbf16, #tpu.memory_space<vmem>>, %arg3: memref<128x384xbf16, #tpu.memory_space<vmem>>, %arg4: memref<1x384xf32, #tpu.memory_space<vmem>>, %arg5: memref<384x128xbf16, #tpu.memory_space<vmem>>, %arg6: memref<1x128xf32, #tpu.memory_space<vmem>>, %arg7: memref<32x128xf32, #tpu.memory_space<vmem>>, %arg8: memref<32x384xf32, #tpu.memory_space<vmem>>) attributes {dimension_semantics = [#tpu.dimension_semantics<parallel>], iteration_bounds = array<i64: 2>, scalar_prefetch = 0 : i64, scratch_operands = 0 : i64, tpu.core_type = #tpu.core_type<tc>, window_params = [{transform_indices = @transform_0, window_bounds = array<i64: 32, 128>}, {transform_indices = @transform_1, window_bounds = array<i64: 32, 384>}, {pipeline_mode = #tpu.pipeline_mode<synchronous>, transform_indices = @transform_2, window_bounds = array<i64: 128, 384>}, {pipeline_mode = #tpu.pipeline_mode<synchronous>, transform_indices = @transform_3, window_bounds = array<i64: 1, 384>}, {pipeline_mode = #tpu.pipeline_mode<synchronous>, transform_indices = @transform_4, window_bounds = array<i64: 384, 128>}, {pipeline_mode = #tpu.pipeline_mode<synchronous>, transform_indices = @transform_5, window_bounds = array<i64: 1, 128>}, {transform_indices = @transform_6, window_bounds = array<i64: 32, 128>}, {transform_indices = @transform_7, window_bounds = array<i64: 32, 384>}]} {
    %c0 = arith.constant 0 : index
    %c0_0 = arith.constant 0 : index
    %0 = vector.load %arg1[%c0, %c0_0] : memref<32x128xbf16, #tpu.memory_space<vmem>>, vector<32x128xbf16>
    %c0_1 = arith.constant 0 : index
    %c0_2 = arith.constant 0 : index
    %1 = vector.load %arg3[%c0_1, %c0_2] : memref<128x384xbf16, #tpu.memory_space<vmem>>, vector<128x384xbf16>
    %cst = arith.constant dense<0.000000e+00> : vector<32x384xf32>
    %2 = tpu.matmul %0, %1, %cst {dimension_numbers = #tpu.dot_dimension_numbers<[1], [0], [0], [1], [0, 0, 1, 1], [], []>} : vector<32x128xbf16>, vector<128x384xbf16>, vector<32x384xf32> -> vector<32x384xf32>
    %c0_3 = arith.constant 0 : index
    %c0_4 = arith.constant 0 : index
    %3 = vector.load %arg4[%c0_3, %c0_4] : memref<1x384xf32, #tpu.memory_space<vmem>>, vector<1x384xf32>
    %4 = vector.broadcast %3 : vector<1x384xf32> to vector<32x384xf32>
    %5 = arith.addf %2, %4 : vector<32x384xf32>
    %c0_5 = arith.constant 0 : index
    %c0_6 = arith.constant 0 : index
    %6 = vector.load %arg2[%c0_5, %c0_6] : memref<32x384xbf16, #tpu.memory_space<vmem>>, vector<32x384xbf16>
    %7 = arith.extf %6 : vector<32x384xbf16> to vector<32x384xf32>
    %8 = arith.addf %5, %7 : vector<32x384xf32>
    %cst_7 = arith.constant 0.000000e+00 : f32
    %9 = vector.broadcast %cst_7 : f32 to vector<32x384xf32>
    %10 = arith.maximumf %8, %9 : vector<32x384xf32>
    %c0_8 = arith.constant 0 : index
    %c0_9 = arith.constant 0 : index
    %11 = vector.load %arg8[%c0_8, %c0_9] : memref<32x384xf32, #tpu.memory_space<vmem>>, vector<32x384xf32>
    tpu.vector_store %arg8[%c0_8, %c0_9], %10 {strides = array<i32>} : memref<32x384xf32, #tpu.memory_space<vmem>>, vector<32x384xf32>,
    %12 = arith.truncf %10 : vector<32x384xf32> to vector<32x384xbf16>
    %c0_10 = arith.constant 0 : index
    %c0_11 = arith.constant 0 : index
    %13 = vector.load %arg5[%c0_10, %c0_11] : memref<384x128xbf16, #tpu.memory_space<vmem>>, vector<384x128xbf16>
    %cst_12 = arith.constant dense<0.000000e+00> : vector<32x128xf32>
    %14 = tpu.matmul %12, %13, %cst_12 {dimension_numbers = #tpu.dot_dimension_numbers<[1], [0], [0], [1], [0, 0, 1, 1], [], []>} : vector<32x384xbf16>, vector<384x128xbf16>, vector<32x128xf32> -> vector<32x128xf32>
    %c0_13 = arith.constant 0 : index
    %c0_14 = arith.constant 0 : index
    %15 = vector.load %arg6[%c0_13, %c0_14] : memref<1x128xf32, #tpu.memory_space<vmem>>, vector<1x128xf32>
    %16 = vector.broadcast %15 : vector<1x128xf32> to vector<32x128xf32>
    %17 = arith.addf %14, %16 : vector<32x128xf32>
    %c0_15 = arith.constant 0 : index
    %c0_16 = arith.constant 0 : index
    %18 = vector.load %arg7[%c0_15, %c0_16] : memref<32x128xf32, #tpu.memory_space<vmem>>, vector<32x128xf32>
    tpu.vector_store %arg7[%c0_15, %c0_16], %17 {strides = array<i32>} : memref<32x128xf32, #tpu.memory_space<vmem>>, vector<32x128xf32>,
    return
  }
  func.func @transform_0(%arg0: i32) -> (i32, i32) {
    %c0_i32 = arith.constant 0 : i32
    %c0_i32_0 = arith.constant 0 : i32
    return %arg0, %c0_i32 : i32, i32
  }
  func.func @transform_1(%arg0: i32) -> (i32, i32) {
    %c0_i32 = arith.constant 0 : i32
    %c0_i32_0 = arith.constant 0 : i32
    return %arg0, %c0_i32 : i32, i32
  }
  func.func @transform_2(%arg0: i32) -> (i32, i32) {
    %c0_i32 = arith.constant 0 : i32
    %c0_i32_0 = arith.constant 0 : i32
    %c0_i32_1 = arith.constant 0 : i32
    return %c0_i32, %c0_i32_0 : i32, i32
  }
  func.func @transform_3(%arg0: i32) -> (i32, i32) {
    %c0_i32 = arith.constant 0 : i32
    %c0_i32_0 = arith.constant 0 : i32
    %c0_i32_1 = arith.constant 0 : i32
    return %c0_i32, %c0_i32_0 : i32, i32
  }
  func.func @transform_4(%arg0: i32) -> (i32, i32) {
    %c0_i32 = arith.constant 0 : i32
    %c0_i32_0 = arith.constant 0 : i32
    %c0_i32_1 = arith.constant 0 : i32
    return %c0_i32, %c0_i32_0 : i32, i32
  }
  func.func @transform_5(%arg0: i32) -> (i32, i32) {
    %c0_i32 = arith.constant 0 : i32
    %c0_i32_0 = arith.constant 0 : i32
    %c0_i32_1 = arith.constant 0 : i32
    return %c0_i32, %c0_i32_0 : i32, i32
  }
  func.func @transform_6(%arg0: i32) -> (i32, i32) {
    %c0_i32 = arith.constant 0 : i32
    %c0_i32_0 = arith.constant 0 : i32
    return %arg0, %c0_i32 : i32, i32
  }
  func.func @transform_7(%arg0: i32) -> (i32, i32) {
    %c0_i32 = arith.constant 0 : i32
    %c0_i32_0 = arith.constant 0 : i32
    return %arg0, %c0_i32 : i32, i32
  }
}

</mosaic_0001>

<llo_original>
// kernel: feedforward_with_compression_state.1
$region0: #{feedforward_with_compression_state.1}
  #allocation0 [shape = 'u32[]', space=smem, size = 0x4, offset = 0x4, fixed_abs, tag = 'smem constant byte address 0x4 - core index']
  #allocation1 [shape = 'u32[72,128]{1,0:T(1,128)}', space=vmem, size = 0x9000, scoped, tag = 'internal scratch']
  %s0 = inlined_call_operand.vmem [shape: bf16[64,128], index: 0, kind: input, shape index: {}]
  %s1 = inlined_call_operand.vmem [shape: bf16[64,384], index: 1, kind: input, shape index: {}]
  %s2 = inlined_call_operand.vmem [shape: bf16[128,384], index: 2, kind: input, shape index: {}]
  %s3 = inlined_call_operand.vmem [shape: f32[1,384], index: 3, kind: input, shape index: {}]
  %s4 = inlined_call_operand.vmem [shape: bf16[384,128], index: 4, kind: input, shape index: {}]
  %s5 = inlined_call_operand.vmem [shape: f32[1,128], index: 5, kind: input, shape index: {}]
  %s6 = inlined_call_operand.vmem [shape: f32[64,128], index: 6, kind: output, shape index: {0}]
  %s7 = inlined_call_operand.vmem [shape: f32[64,384], index: 7, kind: output, shape index: {1}]
  %8 = xla_tuple %s6, %s7
  %s9 = sld [smem:[#allocation0]]
  $region65: #{feedforward_with_compression_state.1} parent=0
    _
  %s11 = ssub.s32 1, %s9
  %s12 = scalar_select 0, %s11, %s9
  loop: start=0, step=1, limit=4
  $region2: #{feedforward_with_compression_state.1} parent=0 // loop_pre_header
    _
  $region3: #{feedforward_with_compression_state.1} parent=0 // loop_header
    %s14 = sphi 0, %s18
    %p15 = scmp.ge.s32.totalorder %s14, 4
    %s24 = sphi 0, %s26
    %s27 = sphi 0, %s24
    %s28 = sphi 0, %s27
    %s44 = sphi 0, %s28
    %s50 = sphi 0, %s52
    %s53 = sphi 0, %s50
    %s54 = sphi 0, %s53
    %s70 = sphi 0, %s54
    %s74 = sphi 0, %s74
    %s76 = sphi 0, %s74
    %s77 = sphi 0, %s76
    %s91 = sphi 0, %s77
    %s95 = sphi 0, %s95
    %s97 = sphi 0, %s95
    %s98 = sphi 0, %s97
    %s112 = sphi 0, %s98
    %s116 = sphi 0, %s116
    %s118 = sphi 0, %s116
    %s119 = sphi 0, %s118
    %s133 = sphi 0, %s119
    %s137 = sphi 0, %s137
    %s139 = sphi 0, %s137
    %s140 = sphi 0, %s139
    %s154 = sphi 0, %s140
    %s160 = sphi 0, %s162
    %s163 = sphi 0, %s160
    %s164 = sphi 0, %s163
    %s180 = sphi 0, %s164
    %s186 = sphi 0, %s188
    %s189 = sphi 0, %s186
    %s190 = sphi 0, %s189
    %s206 = sphi 0, %s190
  $region4: #{feedforward_with_compression_state.1} parent=0 // loop_header_branch
    %17 = sbr.rel (%p15) target = $region8
  $region5: #{feedforward_with_compression_state.1} parent=0 // loop_body
    %s19 = ssub.s32 %s14, 1
    %s20 = ssub.s32 %s14, 2
    %s21 = sadd.s32 %s14, 1
    %s22 = ssub.s32 %s14, %s21
    %p23 = scmp.eq.s32.totalorder %s22, 0
    %s25 = sadd.s32 %s24, 1
    %s26 = scalar_select %p23, %s24, %s25
    %p29 = pneg %p23
    %p30 = scmp.eq.s32.totalorder %s14, 1
    %p31 = por %p29, %p30
    %p32 = scmp.ne.s32.totalorder %s24, %s27
    %p33 = scmp.eq.s32.totalorder %s14, 0
    %p34 = por %p32, %p33
    %p35 = scmp.ne.s32.totalorder %s24, %s27
    %p36 = scmp.eq.s32.totalorder %s19, 1
    %p37 = por %p35, %p36
    %p38 = scmp.ne.s32.totalorder %s27, %s28
    %p39 = scmp.eq.s32.totalorder %s19, 0
    %p40 = por %p38, %p39
    %p41 = scmp.ne.s32.totalorder %s27, %s28
    %p42 = scmp.eq.s32.totalorder %s20, 1
    %p43 = por %p41, %p42
    %p45 = scmp.ne.s32.totalorder %s28, %s44
    %p46 = scmp.eq.s32.totalorder %s20, 0
    %p47 = por %p45, %p46
    %s48 = ssub.s32 %s14, %s21
    %p49 = scmp.eq.s32.totalorder %s48, 0
    %s51 = sadd.s32 %s50, 1
    %s52 = scalar_select %p49, %s50, %s51
    %p55 = pneg %p49
    %p56 = scmp.eq.s32.totalorder %s14, 1
    %p57 = por %p55, %p56
    %p58 = scmp.ne.s32.totalorder %s50, %s53
    %p59 = scmp.eq.s32.totalorder %s14, 0
    %p60 = por %p58, %p59
    %p61 = scmp.ne.s32.totalorder %s50, %s53
    %p62 = scmp.eq.s32.totalorder %s19, 1
    %p63 = por %p61, %p62
    %p64 = scmp.ne.s32.totalorder %s53, %s54
    %p65 = scmp.eq.s32.totalorder %s19, 0
    %p66 = por %p64, %p65
    %p67 = scmp.ne.s32.totalorder %s53, %s54
    %p68 = scmp.eq.s32.totalorder %s20, 1
    %p69 = por %p67, %p68
    %p71 = scmp.ne.s32.totalorder %s54, %s70
    %p72 = scmp.eq.s32.totalorder %s20, 0
    %p73 = por %p71, %p72
    %s75 = sadd.s32 %s74, 1
    %p78 = scmp.eq.s32.totalorder %s14, 1
    %p79 = scmp.ne.s32.totalorder %s74, %s76
    %p80 = scmp.eq.s32.totalorder %s14, 0
    %p81 = por %p79, %p80
    %p82 = scmp.ne.s32.totalorder %s74, %s76
    %p83 = scmp.eq.s32.totalorder %s19, 1
    %p84 = por %p82, %p83
    %p85 = scmp.ne.s32.totalorder %s76, %s77
    %p86 = scmp.eq.s32.totalorder %s19, 0
    %p87 = por %p85, %p86
    %p88 = scmp.ne.s32.totalorder %s76, %s77
    %p89 = scmp.eq.s32.totalorder %s20, 1
    %p90 = por %p88, %p89
    %p92 = scmp.ne.s32.totalorder %s77, %s91
    %p93 = scmp.eq.s32.totalorder %s20, 0
    %p94 = por %p92, %p93
    %s96 = sadd.s32 %s95, 1
    %p99 = scmp.eq.s32.totalorder %s14, 1
    %p100 = scmp.ne.s32.totalorder %s95, %s97
    %p101 = scmp.eq.s32.totalorder %s14, 0
    %p102 = por %p100, %p101
    %p103 = scmp.ne.s32.totalorder %s95, %s97
    %p104 = scmp.eq.s32.totalorder %s19, 1
    %p105 = por %p103, %p104
    %p106 = scmp.ne.s32.totalorder %s97, %s98
    %p107 = scmp.eq.s32.totalorder %s19, 0
    %p108 = por %p106, %p107
    %p109 = scmp.ne.s32.totalorder %s97, %s98
    %p110 = scmp.eq.s32.totalorder %s20, 1
    %p111 = por %p109, %p110
    %p113 = scmp.ne.s32.totalorder %s98, %s112
    %p114 = scmp.eq.s32.totalorder %s20, 0
    %p115 = por %p113, %p114
    %s117 = sadd.s32 %s116, 1
    %p120 = scmp.eq.s32.totalorder %s14, 1
    %p121 = scmp.ne.s32.totalorder %s116, %s118
    %p122 = scmp.eq.s32.totalorder %s14, 0
    %p123 = por %p121, %p122
    %p124 = scmp.ne.s32.totalorder %s116, %s118
    %p125 = scmp.eq.s32.totalorder %s19, 1
    %p126 = por %p124, %p125
    %p127 = scmp.ne.s32.totalorder %s118, %s119
    %p128 = scmp.eq.s32.totalorder %s19, 0
    %p129 = por %p127, %p128
    %p130 = scmp.ne.s32.totalorder %s118, %s119
    %p131 = scmp.eq.s32.totalorder %s20, 1
    %p132 = por %p130, %p131
    %p134 = scmp.ne.s32.totalorder %s119, %s133
    %p135 = scmp.eq.s32.totalorder %s20, 0
    %p136 = por %p134, %p135
    %s138 = sadd.s32 %s137, 1
    %p141 = scmp.eq.s32.totalorder %s14, 1
    %p142 = scmp.ne.s32.totalorder %s137, %s139
    %p143 = scmp.eq.s32.totalorder %s14, 0
    %p144 = por %p142, %p143
    %p145 = scmp.ne.s32.totalorder %s137, %s139
    %p146 = scmp.eq.s32.totalorder %s19, 1
    %p147 = por %p145, %p146
    %p148 = scmp.ne.s32.totalorder %s139, %s140
    %p149 = scmp.eq.s32.totalorder %s19, 0
    %p150 = por %p148, %p149
    %p151 = scmp.ne.s32.totalorder %s139, %s140
    %p152 = scmp.eq.s32.totalorder %s20, 1
    %p153 = por %p151, %p152
    %p155 = scmp.ne.s32.totalorder %s140, %s154
    %p156 = scmp.eq.s32.totalorder %s20, 0
    %p157 = por %p155, %p156
    %s158 = ssub.s32 %s14, %s21
    %p159 = scmp.eq.s32.totalorder %s158, 0
    %s161 = sadd.s32 %s160, 1
    %s162 = scalar_select %p159, %s160, %s161
    %p165 = pneg %p159
    %p166 = scmp.eq.s32.totalorder %s14, 1
    %p167 = por %p165, %p166
    %p168 = scmp.ne.s32.totalorder %s160, %s163
    %p169 = scmp.eq.s32.totalorder %s14, 0
    %p170 = por %p168, %p169
    %p171 = scmp.ne.s32.totalorder %s160, %s163
    %p172 = scmp.eq.s32.totalorder %s19, 1
    %p173 = por %p171, %p172
    %p174 = scmp.ne.s32.totalorder %s163, %s164
    %p175 = scmp.eq.s32.totalorder %s19, 0
    %p176 = por %p174, %p175
    %p177 = scmp.ne.s32.totalorder %s163, %s164
    %p178 = scmp.eq.s32.totalorder %s20, 1
    %p179 = por %p177, %p178
    %p181 = scmp.ne.s32.totalorder %s164, %s180
    %p182 = scmp.eq.s32.totalorder %s20, 0
    %p183 = por %p181, %p182
    %s184 = ssub.s32 %s14, %s21
    %p185 = scmp.eq.s32.totalorder %s184, 0
    %s187 = sadd.s32 %s186, 1
    %s188 = scalar_select %p185, %s186, %s187
    %p191 = pneg %p185
    %p192 = scmp.eq.s32.totalorder %s14, 1
    %p193 = por %p191, %p192
    %p194 = scmp.ne.s32.totalorder %s186, %s189
    %p195 = scmp.eq.s32.totalorder %s14, 0
    %p196 = por %p194, %p195
    %p197 = scmp.ne.s32.totalorder %s186, %s189
    %p198 = scmp.eq.s32.totalorder %s19, 1
    %p199 = por %p197, %p198
    %p200 = scmp.ne.s32.totalorder %s189, %s190
    %p201 = scmp.eq.s32.totalorder %s19, 0
    %p202 = por %p200, %p201
    %p203 = scmp.ne.s32.totalorder %s189, %s190
    %p204 = scmp.eq.s32.totalorder %s20, 1
    %p205 = por %p203, %p204
    %p207 = scmp.ne.s32.totalorder %s190, %s206
    %p208 = scmp.eq.s32.totalorder %s20, 0
    %p209 = por %p207, %p208
    %p210 = scmp.le.s32.totalorder 1, %s14
    %p211 = scmp.lt.s32.totalorder %s14, 3
    %p212 = pnand %p210, %p211
    %p213 = pneg %p212
    // Predicated region
    $region9: #{feedforward_with_compression_state.1} parent=5 // pred_check
      _
    $region10: #{feedforward_with_compression_state.1} parent=5 // pred_check_branch
      %215 = sbr.rel (%p212) target = $region12
    $region11: #{feedforward_with_compression_state.1} parent=5 // pred_region
      %s216 = ssub.s32 %s14, 1
      // Predicated region
      $region13: #{feedforward_with_compression_state.1} parent=11 // pred_check
        %p217 = pneg %p87
      $region14: #{feedforward_with_compression_state.1} parent=11 // pred_check_branch
        %219 = sbr.rel (%p217) target = $region16
      $region15: #{feedforward_with_compression_state.1} parent=11 // pred_region
        _
      $region16: #{feedforward_with_compression_state.1} parent=11 // pred_fallthru
        _
      // Predicated region
      $region17: #{feedforward_with_compression_state.1} parent=11 // pred_check
        %p220 = pneg %p108
      $region18: #{feedforward_with_compression_state.1} parent=11 // pred_check_branch
        %222 = sbr.rel (%p220) target = $region20
      $region19: #{feedforward_with_compression_state.1} parent=11 // pred_region
        _
      $region20: #{feedforward_with_compression_state.1} parent=11 // pred_fallthru
        _
      // Predicated region
      $region21: #{feedforward_with_compression_state.1} parent=11 // pred_check
        %p223 = pneg %p129
      $region22: #{feedforward_with_compression_state.1} parent=11 // pred_check_branch
        %225 = sbr.rel (%p223) target = $region24
      $region23: #{feedforward_with_compression_state.1} parent=11 // pred_region
        _
      $region24: #{feedforward_with_compression_state.1} parent=11 // pred_fallthru
        _
      // Predicated region
      $region25: #{feedforward_with_compression_state.1} parent=11 // pred_check
        %p226 = pneg %p150
      $region26: #{feedforward_with_compression_state.1} parent=11 // pred_check_branch
        %228 = sbr.rel (%p226) target = $region28
      $region27: #{feedforward_with_compression_state.1} parent=11 // pred_region
        _
      $region28: #{feedforward_with_compression_state.1} parent=11 // pred_fallthru
        _
    $region12: #{feedforward_with_compression_state.1} parent=5 // pred_fallthru
      _
    %p229 = scmp.lt.s32.totalorder %s14, 2
    // Predicated region
    $region29: #{feedforward_with_compression_state.1} parent=5 // pred_check
      %p230 = pneg %p229
    $region30: #{feedforward_with_compression_state.1} parent=5 // pred_check_branch
      %232 = sbr.rel (%p230) target = $region32
    $region31: #{feedforward_with_compression_state.1} parent=5 // pred_region
      // Predicated region
      $region33: #{feedforward_with_compression_state.1} parent=31 // pred_check
        %p233 = pneg %p34
      $region34: #{feedforward_with_compression_state.1} parent=31 // pred_check_branch
        %235 = sbr.rel (%p233) target = $region36
      $region35: #{feedforward_with_compression_state.1} parent=31 // pred_region
        %s236 = smul.u32 4, %s14
        %p237 = scmp.lt.s32.totalorder %s236, 7
        %s238 = scalar_select %p237, %s236, 7
        %s239 = smul.addr %s238, 4
        %s240 = scalar_lea.vmem %s0, %s239
        %s241 = smul.u32 4, %s14
      $region36: #{feedforward_with_compression_state.1} parent=31 // pred_fallthru
        _
      // Predicated region
      $region37: #{feedforward_with_compression_state.1} parent=31 // pred_check
        %p242 = pneg %p60
      $region38: #{feedforward_with_compression_state.1} parent=31 // pred_check_branch
        %244 = sbr.rel (%p242) target = $region40
      $region39: #{feedforward_with_compression_state.1} parent=31 // pred_region
        %s245 = smul.u32 4, %s14
        %p246 = scmp.lt.s32.totalorder %s245, 7
        %s247 = scalar_select %p246, %s245, 7
        %s248 = smul.addr %s247, 3
        %s249 = smul.addr %s248, 4
        %s250 = scalar_lea.vmem %s1, %s249
        %s251 = smul.u32 4, %s14
      $region40: #{feedforward_with_compression_state.1} parent=31 // pred_fallthru
        _
    $region32: #{feedforward_with_compression_state.1} parent=5 // pred_fallthru
      _
    %p252 = scmp.le.s32.totalorder 1, %s14
    %p253 = scmp.lt.s32.totalorder %s14, 3
    %p254 = pnand %p252, %p253
    %p255 = pneg %p254
    // Predicated region
    $region41: #{feedforward_with_compression_state.1} parent=5 // pred_check
      _
    $region42: #{feedforward_with_compression_state.1} parent=5 // pred_check_branch
      %257 = sbr.rel (%p254) target = $region44
    $region43: #{feedforward_with_compression_state.1} parent=5 // pred_region
      %s258 = ssub.s32 %s14, 1
      %s259 = smul.u32 4, %s19
      %p260 = scmp.lt.s32.totalorder %s259, 7
      %s261 = scalar_select %p260, %s259, 7
      %s262 = smul.addr %s261, 4
      %s263 = scalar_lea.vmem %s0, %s262
      %p264 = pneg %p40
      %p265 = pneg %p37
      %s266 = smul.u32 4, %s19
      %p267 = scmp.lt.s32.totalorder %s266, 7
      %s268 = scalar_select %p267, %s266, 7
      %s269 = smul.addr %s268, 3
      %s270 = smul.addr %s269, 4
      %s271 = scalar_lea.vmem %s1, %s270
      %p272 = pneg %p66
      %p273 = pneg %p63
      %p274 = pneg %p87
      %p275 = pneg %p84
      %p276 = pneg %p108
      %p277 = pneg %p105
      %p278 = pneg %p129
      %p279 = pneg %p126
      %p280 = pneg %p150
      %p281 = pneg %p147
      %p282 = pneg %p176
      %p283 = pneg %p173
      %s284 = smul.u32 4, %s19
      %p285 = scmp.lt.s32.totalorder %s284, 7
      %s286 = scalar_select %p285, %s284, 7
      %s287 = smul.addr %s286, 8
      %s288 = scalar_lea.vmem %s6, %s287
      %p289 = pneg %p202
      %p290 = pneg %p199
      %s291 = smul.u32 4, %s19
      %p292 = scmp.lt.s32.totalorder %s291, 7
      %s293 = scalar_select %p292, %s291, 7
      %s294 = smul.addr %s293, 3
      %s295 = smul.addr %s294, 8
      %s296 = scalar_lea.vmem %s7, %s295
      %s297 = smul.u32 4, %s19
      %p298 = scmp.lt.s32.totalorder %s297, 7
      %s299 = scalar_select %p298, %s297, 7
      %s300 = smul.addr %s299, 4
      %s301 = scalar_lea.vmem %s0, %s300
      %s302 = smul.u32 4, %s19
      %s303 = smul.u32 4, %s19
      %p304 = scmp.lt.s32.totalorder %s303, 7
      %s305 = scalar_select %p304, %s303, 7
      %s306 = smul.addr %s305, 3
      %s307 = smul.addr %s306, 4
      %s308 = scalar_lea.vmem %s1, %s307
      %s309 = smul.u32 4, %s19
      %s310 = smul.u32 4, %s19
      %p311 = scmp.lt.s32.totalorder %s310, 7
      %s312 = scalar_select %p311, %s310, 7
      %s313 = smul.addr %s312, 8
      %s314 = scalar_lea.vmem %s6, %s313
      %s315 = smul.u32 4, %s19
      %s316 = smul.u32 4, %s19
      %p317 = scmp.lt.s32.totalorder %s316, 7
      %s318 = scalar_select %p317, %s316, 7
      %s319 = smul.addr %s318, 3
      %s320 = smul.addr %s319, 8
      %s321 = scalar_lea.vmem %s7, %s320
      %s322 = smul.u32 4, %s19
      %v323 = vld [vmem:[%s301] sm:$0xf]
      %v324 = vld [vmem:[%s301 + $0x4] sm:$0xf]
      %v325 = vld [vmem:[%s301 + $0x8] sm:$0xf]
      %v326 = vld [vmem:[%s301 + $0xc] sm:$0xf]
      %v327 = vld [vmem:[%s2] sm:$0xff]
      %v328 = vld [vmem:[%s2 + $0x8] sm:$0xf]
      %v329 = vld [vmem:[%s2 + $0xc] sm:$0xff]
      %v330 = vld [vmem:[%s2 + $0x14] sm:$0xf]
      %v331 = vld [vmem:[%s2 + $0x18] sm:$0xff]
      %v332 = vld [vmem:[%s2 + $0x20] sm:$0xf]
      %v333 = vld [vmem:[%s2 + $0x24] sm:$0xff]
      %v334 = vld [vmem:[%s2 + $0x2c] sm:$0xf]
      %v335 = vld [vmem:[%s2 + $0x30] sm:$0xff]
      %v336 = vld [vmem:[%s2 + $0x38] sm:$0xf]
      %v337 = vld [vmem:[%s2 + $0x3c] sm:$0xff]
      %v338 = vld [vmem:[%s2 + $0x44] sm:$0xf]
      %v339 = vld [vmem:[%s2 + $0x48] sm:$0xff]
      %v340 = vld [vmem:[%s2 + $0x50] sm:$0xf]
      %v341 = vld [vmem:[%s2 + $0x54] sm:$0xff]
      %v342 = vld [vmem:[%s2 + $0x5c] sm:$0xf]
      %v343 = vld [vmem:[%s2 + $0x60] sm:$0xff]
      %v344 = vld [vmem:[%s2 + $0x68] sm:$0xf]
      %v345 = vld [vmem:[%s2 + $0x6c] sm:$0xff]
      %v346 = vld [vmem:[%s2 + $0x74] sm:$0xf]
      %v347 = vld [vmem:[%s2 + $0x78] sm:$0xff]
      %v348 = vld [vmem:[%s2 + $0x80] sm:$0xf]
      %v349 = vld [vmem:[%s2 + $0x84] sm:$0xff]
      %v350 = vld [vmem:[%s2 + $0x8c] sm:$0xf]
      %v351 = vld [vmem:[%s2 + $0x90] sm:$0xff]
      %v352 = vld [vmem:[%s2 + $0x98] sm:$0xf]
      %v353 = vld [vmem:[%s2 + $0x9c] sm:$0xff]
      %v354 = vld [vmem:[%s2 + $0xa4] sm:$0xf]
      %v355 = vld [vmem:[%s2 + $0xa8] sm:$0xff]
      %v356 = vld [vmem:[%s2 + $0xb0] sm:$0xf]
      %v357 = vld [vmem:[%s2 + $0xb4] sm:$0xff]
      %v358 = vld [vmem:[%s2 + $0xbc] sm:$0xf]
      %v359 = vld [vmem:[%s3] sm:$0x7]
      %v361 = vperm.slane %v359, 0
      %v362 = vperm.slane %v359, 1
      %v363 = vperm.slane %v359, 2
      %v371 = vunpack.c.l.b16 %v323
      %v372 = vunpack.c.l.b16 %v324
      %v373 = vunpack.c.l.b16 %v325
      %v374 = vunpack.c.l.b16 %v326
      %v375 = vpack.c.b16 %v372, %v371
      %v376 = vpack.c.b16 %v374, %v373
      %v411 = vunpack.c.l.b16 %v327
      %v412 = vunpack.c.h.b16 %v327
      %v413 = vunpack.c.l.b16 %v328
      %v414 = vunpack.c.l.b16 %v329
      %v415 = vunpack.c.h.b16 %v329
      %v416 = vunpack.c.l.b16 %v330
      %v417 = vunpack.c.l.b16 %v331
      %v418 = vunpack.c.h.b16 %v331
      %v419 = vunpack.c.l.b16 %v332
      %v420 = vunpack.c.l.b16 %v333
      %v421 = vunpack.c.h.b16 %v333
      %v422 = vunpack.c.l.b16 %v334
      %v423 = vunpack.c.l.b16 %v335
      %v424 = vunpack.c.h.b16 %v335
      %v425 = vunpack.c.l.b16 %v336
      %v426 = vunpack.c.l.b16 %v337
      %v427 = vunpack.c.h.b16 %v337
      %v428 = vunpack.c.l.b16 %v338
      %v429 = vunpack.c.l.b16 %v339
      %v430 = vunpack.c.h.b16 %v339
      %v431 = vunpack.c.l.b16 %v340
      %v432 = vunpack.c.l.b16 %v341
      %v433 = vunpack.c.h.b16 %v341
      %v434 = vunpack.c.l.b16 %v342
      %v435 = vunpack.c.l.b16 %v343
      %v436 = vunpack.c.h.b16 %v343
      %v437 = vunpack.c.l.b16 %v344
      %v438 = vunpack.c.l.b16 %v345
      %v439 = vunpack.c.h.b16 %v345
      %v440 = vunpack.c.l.b16 %v346
      %v441 = vunpack.c.l.b16 %v347
      %v442 = vunpack.c.h.b16 %v347
      %v443 = vunpack.c.l.b16 %v348
      %v444 = vunpack.c.l.b16 %v349
      %v445 = vunpack.c.h.b16 %v349
      %v446 = vunpack.c.l.b16 %v350
      %v447 = vunpack.c.l.b16 %v351
      %v448 = vunpack.c.h.b16 %v351
      %v449 = vunpack.c.l.b16 %v352
      %v450 = vunpack.c.l.b16 %v353
      %v451 = vunpack.c.h.b16 %v353
      %v452 = vunpack.c.l.b16 %v354
      %v453 = vunpack.c.l.b16 %v355
      %v454 = vunpack.c.h.b16 %v355
      %v455 = vunpack.c.l.b16 %v356
      %v456 = vunpack.c.l.b16 %v357
      %v457 = vunpack.c.h.b16 %v357
      %v458 = vunpack.c.l.b16 %v358
      %v459 = vpack.c.b16 %v414, %v411
      %v460 = vpack.c.b16 %v415, %v412
      %v461 = vpack.c.b16 %v416, %v413
      %v462 = vpack.c.b16 %v420, %v417
      %v463 = vpack.c.b16 %v421, %v418
      %v464 = vpack.c.b16 %v422, %v419
      %v465 = vpack.c.b16 %v426, %v423
      %v466 = vpack.c.b16 %v427, %v424
      %v467 = vpack.c.b16 %v428, %v425
      %v468 = vpack.c.b16 %v432, %v429
      %v469 = vpack.c.b16 %v433, %v430
      %v470 = vpack.c.b16 %v434, %v431
      %v471 = vpack.c.b16 %v438, %v435
      %v472 = vpack.c.b16 %v439, %v436
      %v473 = vpack.c.b16 %v440, %v437
      %v474 = vpack.c.b16 %v444, %v441
      %v475 = vpack.c.b16 %v445, %v442
      %v476 = vpack.c.b16 %v446, %v443
      %v477 = vpack.c.b16 %v450, %v447
      %v478 = vpack.c.b16 %v451, %v448
      %v479 = vpack.c.b16 %v452, %v449
      %v480 = vpack.c.b16 %v456, %v453
      %v481 = vpack.c.b16 %v457, %v454
      %v482 = vpack.c.b16 %v458, %v455
      %507 = vmatpush.bf16.msra.mxu0 %v480
      %508 = vmatpush.bf16.msra.mxu0 %v477
      %509 = vmatpush.bf16.msra.mxu0 %v474
      %510 = vmatpush.bf16.msra.mxu0 %v471
      %511 = vmatpush.bf16.msra.mxu0 %v468
      %512 = vmatpush.bf16.msra.mxu0 %v465
      %513 = vmatpush.bf16.msra.mxu0 %v462
      %514 = vmatpush.bf16.msra.mxu0 %v459
      %515 = vmatmul.bf16.gmra.mxu0 %v375
      %v516 = vpop.f32.mrf.mxu0
      %v517 = vadd.f32 %v361, %v516
      %v518 = vpop.f32.mrf.mxu0
      %v519 = vadd.f32 %v361, %v518
      %520 = vmatmul.bf16.gmra.mxu0 %v376
      %v521 = vpop.f32.mrf.mxu0
      %v522 = vadd.f32 %v361, %v521
      %v523 = vpop.f32.mrf.mxu0
      %v524 = vadd.f32 %v361, %v523
      %525 = vdwg.mxu0
      %526 = vmatpush.bf16.msra.mxu0 %v481
      %527 = vmatpush.bf16.msra.mxu0 %v478
      %528 = vmatpush.bf16.msra.mxu0 %v475
      %529 = vmatpush.bf16.msra.mxu0 %v472
      %530 = vmatpush.bf16.msra.mxu0 %v469
      %531 = vmatpush.bf16.msra.mxu0 %v466
      %532 = vmatpush.bf16.msra.mxu0 %v463
      %533 = vmatpush.bf16.msra.mxu0 %v460
      %534 = vmatmul.bf16.gmra.mxu0 %v375
      %v535 = vpop.f32.mrf.mxu0
      %v536 = vadd.f32 %v362, %v535
      %v537 = vpop.f32.mrf.mxu0
      %v538 = vadd.f32 %v362, %v537
      %539 = vmatmul.bf16.gmra.mxu0 %v376
      %v540 = vpop.f32.mrf.mxu0
      %v541 = vadd.f32 %v362, %v540
      %v542 = vpop.f32.mrf.mxu0
      %v543 = vadd.f32 %v362, %v542
      %544 = vdwg.mxu0
      %545 = vmatpush.bf16.msra.mxu0 %v482
      %546 = vmatpush.bf16.msra.mxu0 %v479
      %547 = vmatpush.bf16.msra.mxu0 %v476
      %548 = vmatpush.bf16.msra.mxu0 %v473
      %549 = vmatpush.bf16.msra.mxu0 %v470
      %550 = vmatpush.bf16.msra.mxu0 %v467
      %551 = vmatpush.bf16.msra.mxu0 %v464
      %552 = vmatpush.bf16.msra.mxu0 %v461
      %553 = vmatmul.bf16.gmra.mxu0 %v375
      %v554 = vpop.f32.mrf.mxu0
      %v555 = vadd.f32 %v363, %v554
      %v556 = vpop.f32.mrf.mxu0
      %v557 = vadd.f32 %v363, %v556
      %558 = vmatmul.bf16.gmra.mxu0 %v376
      %v559 = vpop.f32.mrf.mxu0
      %v560 = vadd.f32 %v363, %v559
      %v561 = vpop.f32.mrf.mxu0
      %v562 = vadd.f32 %v363, %v561
      %563 = vdwg.mxu0
      %v564 = vld [vmem:[%s308] sm:$0xff]
      %v565 = vld [vmem:[%s308 + $0x8] sm:$0xf]
      %v566 = vld [vmem:[%s308 + $0xc] sm:$0xff]
      %v567 = vld [vmem:[%s308 + $0x14] sm:$0xf]
      %v568 = vld [vmem:[%s308 + $0x18] sm:$0xff]
      %v569 = vld [vmem:[%s308 + $0x20] sm:$0xf]
      %v570 = vld [vmem:[%s308 + $0x24] sm:$0xff]
      %v571 = vld [vmem:[%s308 + $0x2c] sm:$0xf]
      %v572 = vunpack.c.l.bf16 %v564
      %v573 = vunpack.c.h.bf16 %v564
      %v574 = vunpack.c.l.bf16 %v565
      %v575 = vunpack.c.l.bf16 %v566
      %v576 = vunpack.c.h.bf16 %v566
      %v577 = vunpack.c.l.bf16 %v567
      %v578 = vunpack.c.l.bf16 %v568
      %v579 = vunpack.c.h.bf16 %v568
      %v580 = vunpack.c.l.bf16 %v569
      %v581 = vunpack.c.l.bf16 %v570
      %v582 = vunpack.c.h.bf16 %v570
      %v583 = vunpack.c.l.bf16 %v571
      %v584 = vadd.f32 %v517, %v572
      %v585 = vadd.f32 %v536, %v573
      %v586 = vadd.f32 %v555, %v574
      %v587 = vadd.f32 %v519, %v575
      %v588 = vadd.f32 %v538, %v576
      %v589 = vadd.f32 %v557, %v577
      %v590 = vadd.f32 %v522, %v578
      %v591 = vadd.f32 %v541, %v579
      %v592 = vadd.f32 %v560, %v580
      %v593 = vadd.f32 %v524, %v581
      %v594 = vadd.f32 %v543, %v582
      %v595 = vadd.f32 %v562, %v583
      %v596 = vmax.f32 %v584, 0.0
      %v597 = vmax.f32 %v585, 0.0
      %v598 = vmax.f32 %v586, 0.0
      %v599 = vmax.f32 %v587, 0.0
      %v600 = vmax.f32 %v588, 0.0
      %v601 = vmax.f32 %v589, 0.0
      %v602 = vmax.f32 %v590, 0.0
      %v603 = vmax.f32 %v591, 0.0
      %v604 = vmax.f32 %v592, 0.0
      %v605 = vmax.f32 %v593, 0.0
      %v606 = vmax.f32 %v594, 0.0
      %v607 = vmax.f32 %v595, 0.0
      %608 = vst [vmem:[%s321] sm:$0xff] %v596
      %609 = vst [vmem:[%s321 + $0x8] sm:$0xff] %v597
      %610 = vst [vmem:[%s321 + $0x10] sm:$0xff] %v598
      %611 = vst [vmem:[%s321 + $0x18] sm:$0xff] %v599
      %612 = vst [vmem:[%s321 + $0x20] sm:$0xff] %v600
      %613 = vst [vmem:[%s321 + $0x28] sm:$0xff] %v601
      %614 = vst [vmem:[%s321 + $0x30] sm:$0xff] %v602
      %615 = vst [vmem:[%s321 + $0x38] sm:$0xff] %v603
      %616 = vst [vmem:[%s321 + $0x40] sm:$0xff] %v604
      %617 = vst [vmem:[%s321 + $0x48] sm:$0xff] %v605
      %618 = vst [vmem:[%s321 + $0x50] sm:$0xff] %v606
      %619 = vst [vmem:[%s321 + $0x58] sm:$0xff] %v607
      %v620 = vpack.c.bf16 %v599, %v596
      %v621 = vpack.c.bf16 %v600, %v597
      %v622 = vpack.c.bf16 %v601, %v598
      %v623 = vpack.c.bf16 %v605, %v602
      %v624 = vpack.c.bf16 %v606, %v603
      %v625 = vpack.c.bf16 %v607, %v604
      %v626 = vld [vmem:[%s4] sm:$0xf]
      %v627 = vld [vmem:[%s4 + $0x4] sm:$0xf]
      %v628 = vld [vmem:[%s4 + $0x8] sm:$0xf]
      %v629 = vld [vmem:[%s4 + $0xc] sm:$0xf]
      %v630 = vld [vmem:[%s4 + $0x10] sm:$0xf]
      %v631 = vld [vmem:[%s4 + $0x14] sm:$0xf]
      %v632 = vld [vmem:[%s4 + $0x18] sm:$0xf]
      %v633 = vld [vmem:[%s4 + $0x1c] sm:$0xf]
      %v634 = vld [vmem:[%s4 + $0x20] sm:$0xf]
      %v635 = vld [vmem:[%s4 + $0x24] sm:$0xf]
      %v636 = vld [vmem:[%s4 + $0x28] sm:$0xf]
      %v637 = vld [vmem:[%s4 + $0x2c] sm:$0xf]
      %v638 = vld [vmem:[%s4 + $0x30] sm:$0xf]
      %v639 = vld [vmem:[%s4 + $0x34] sm:$0xf]
      %v640 = vld [vmem:[%s4 + $0x38] sm:$0xf]
      %v641 = vld [vmem:[%s4 + $0x3c] sm:$0xf]
      %v642 = vld [vmem:[%s4 + $0x40] sm:$0xf]
      %v643 = vld [vmem:[%s4 + $0x44] sm:$0xf]
      %v644 = vld [vmem:[%s4 + $0x48] sm:$0xf]
      %v645 = vld [vmem:[%s4 + $0x4c] sm:$0xf]
      %v646 = vld [vmem:[%s4 + $0x50] sm:$0xf]
      %v647 = vld [vmem:[%s4 + $0x54] sm:$0xf]
      %v648 = vld [vmem:[%s4 + $0x58] sm:$0xf]
      %v649 = vld [vmem:[%s4 + $0x5c] sm:$0xf]
      %v650 = vld [vmem:[%s4 + $0x60] sm:$0xf]
      %v651 = vld [vmem:[%s4 + $0x64] sm:$0xf]
      %v652 = vld [vmem:[%s4 + $0x68] sm:$0xf]
      %v653 = vld [vmem:[%s4 + $0x6c] sm:$0xf]
      %v654 = vld [vmem:[%s4 + $0x70] sm:$0xf]
      %v655 = vld [vmem:[%s4 + $0x74] sm:$0xf]
      %v656 = vld [vmem:[%s4 + $0x78] sm:$0xf]
      %v657 = vld [vmem:[%s4 + $0x7c] sm:$0xf]
      %v658 = vld [vmem:[%s4 + $0x80] sm:$0xf]
      %v659 = vld [vmem:[%s4 + $0x84] sm:$0xf]
      %v660 = vld [vmem:[%s4 + $0x88] sm:$0xf]
      %v661 = vld [vmem:[%s4 + $0x8c] sm:$0xf]
      %v662 = vld [vmem:[%s4 + $0x90] sm:$0xf]
      %v663 = vld [vmem:[%s4 + $0x94] sm:$0xf]
      %v664 = vld [vmem:[%s4 + $0x98] sm:$0xf]
      %v665 = vld [vmem:[%s4 + $0x9c] sm:$0xf]
      %v666 = vld [vmem:[%s4 + $0xa0] sm:$0xf]
      %v667 = vld [vmem:[%s4 + $0xa4] sm:$0xf]
      %v668 = vld [vmem:[%s4 + $0xa8] sm:$0xf]
      %v669 = vld [vmem:[%s4 + $0xac] sm:$0xf]
      %v670 = vld [vmem:[%s4 + $0xb0] sm:$0xf]
      %v671 = vld [vmem:[%s4 + $0xb4] sm:$0xf]
      %v672 = vld [vmem:[%s4 + $0xb8] sm:$0xf]
      %v673 = vld [vmem:[%s4 + $0xbc] sm:$0xf]
      %v674 = vld [vmem:[%s5] sm:$0x1]
      %v676 = vperm.slane %v674, 0
      %v726 = vunpack.c.l.b16 %v626
      %v727 = vunpack.c.l.b16 %v627
      %v728 = vunpack.c.l.b16 %v628
      %v729 = vunpack.c.l.b16 %v629
      %v730 = vunpack.c.l.b16 %v630
      %v731 = vunpack.c.l.b16 %v631
      %v732 = vunpack.c.l.b16 %v632
      %v733 = vunpack.c.l.b16 %v633
      %v734 = vunpack.c.l.b16 %v634
      %v735 = vunpack.c.l.b16 %v635
      %v736 = vunpack.c.l.b16 %v636
      %v737 = vunpack.c.l.b16 %v637
      %v738 = vunpack.c.l.b16 %v638
      %v739 = vunpack.c.l.b16 %v639
      %v740 = vunpack.c.l.b16 %v640
      %v741 = vunpack.c.l.b16 %v641
      %v742 = vunpack.c.l.b16 %v642
      %v743 = vunpack.c.l.b16 %v643
      %v744 = vunpack.c.l.b16 %v644
      %v745 = vunpack.c.l.b16 %v645
      %v746 = vunpack.c.l.b16 %v646
      %v747 = vunpack.c.l.b16 %v647
      %v748 = vunpack.c.l.b16 %v648
      %v749 = vunpack.c.l.b16 %v649
      %v750 = vunpack.c.l.b16 %v650
      %v751 = vunpack.c.l.b16 %v651
      %v752 = vunpack.c.l.b16 %v652
      %v753 = vunpack.c.l.b16 %v653
      %v754 = vunpack.c.l.b16 %v654
      %v755 = vunpack.c.l.b16 %v655
      %v756 = vunpack.c.l.b16 %v656
      %v757 = vunpack.c.l.b16 %v657
      %v758 = vunpack.c.l.b16 %v658
      %v759 = vunpack.c.l.b16 %v659
      %v760 = vunpack.c.l.b16 %v660
      %v761 = vunpack.c.l.b16 %v661
      %v762 = vunpack.c.l.b16 %v662
      %v763 = vunpack.c.l.b16 %v663
      %v764 = vunpack.c.l.b16 %v664
      %v765 = vunpack.c.l.b16 %v665
      %v766 = vunpack.c.l.b16 %v666
      %v767 = vunpack.c.l.b16 %v667
      %v768 = vunpack.c.l.b16 %v668
      %v769 = vunpack.c.l.b16 %v669
      %v770 = vunpack.c.l.b16 %v670
      %v771 = vunpack.c.l.b16 %v671
      %v772 = vunpack.c.l.b16 %v672
      %v773 = vunpack.c.l.b16 %v673
      %v774 = vpack.c.b16 %v727, %v726
      %v775 = vpack.c.b16 %v729, %v728
      %v776 = vpack.c.b16 %v731, %v730
      %v777 = vpack.c.b16 %v733, %v732
      %v778 = vpack.c.b16 %v735, %v734
      %v779 = vpack.c.b16 %v737, %v736
      %v780 = vpack.c.b16 %v739, %v738
      %v781 = vpack.c.b16 %v741, %v740
      %v782 = vpack.c.b16 %v743, %v742
      %v783 = vpack.c.b16 %v745, %v744
      %v784 = vpack.c.b16 %v747, %v746
      %v785 = vpack.c.b16 %v749, %v748
      %v786 = vpack.c.b16 %v751, %v750
      %v787 = vpack.c.b16 %v753, %v752
      %v788 = vpack.c.b16 %v755, %v754
      %v789 = vpack.c.b16 %v757, %v756
      %v790 = vpack.c.b16 %v759, %v758
      %v791 = vpack.c.b16 %v761, %v760
      %v792 = vpack.c.b16 %v763, %v762
      %v793 = vpack.c.b16 %v765, %v764
      %v794 = vpack.c.b16 %v767, %v766
      %v795 = vpack.c.b16 %v769, %v768
      %v796 = vpack.c.b16 %v771, %v770
      %v797 = vpack.c.b16 %v773, %v772
      %822 = vmatpush.bf16.msra.mxu0 %v781
      %823 = vmatpush.bf16.msra.mxu0 %v780
      %824 = vmatpush.bf16.msra.mxu0 %v779
      %825 = vmatpush.bf16.msra.mxu0 %v778
      %826 = vmatpush.bf16.msra.mxu0 %v777
      %827 = vmatpush.bf16.msra.mxu0 %v776
      %828 = vmatpush.bf16.msra.mxu0 %v775
      %829 = vmatpush.bf16.msra.mxu0 %v774
      %830 = vmatmul.bf16.gmra.mxu0 %v620
      %v831 = vpop.f32.mrf.mxu0
      %v832 = vadd.f32 %v676, %v831
      %v833 = vpop.f32.mrf.mxu0
      %v834 = vadd.f32 %v676, %v833
      %835 = vmatmul.bf16.gmra.mxu0 %v623
      %v836 = vpop.f32.mrf.mxu0
      %v837 = vadd.f32 %v676, %v836
      %v838 = vpop.f32.mrf.mxu0
      %v839 = vadd.f32 %v676, %v838
      %840 = vdwg.mxu0
      %841 = vmatpush.bf16.msra.mxu0 %v789
      %842 = vmatpush.bf16.msra.mxu0 %v788
      %843 = vmatpush.bf16.msra.mxu0 %v787
      %844 = vmatpush.bf16.msra.mxu0 %v786
      %845 = vmatpush.bf16.msra.mxu0 %v785
      %846 = vmatpush.bf16.msra.mxu0 %v784
      %847 = vmatpush.bf16.msra.mxu0 %v783
      %848 = vmatpush.bf16.msra.mxu0 %v782
      %849 = vmatmul.bf16.gmra.mxu0 %v621
      %v850 = vpop.f32.mrf.mxu0
      %v851 = vadd.f32 %v832, %v850
      %v852 = vpop.f32.mrf.mxu0
      %v853 = vadd.f32 %v834, %v852
      %854 = vmatmul.bf16.gmra.mxu0 %v624
      %v855 = vpop.f32.mrf.mxu0
      %v856 = vadd.f32 %v837, %v855
      %v857 = vpop.f32.mrf.mxu0
      %v858 = vadd.f32 %v839, %v857
      %859 = vdwg.mxu0
      %860 = vmatpush.bf16.msra.mxu0 %v797
      %861 = vmatpush.bf16.msra.mxu0 %v796
      %862 = vmatpush.bf16.msra.mxu0 %v795
      %863 = vmatpush.bf16.msra.mxu0 %v794
      %864 = vmatpush.bf16.msra.mxu0 %v793
      %865 = vmatpush.bf16.msra.mxu0 %v792
      %866 = vmatpush.bf16.msra.mxu0 %v791
      %867 = vmatpush.bf16.msra.mxu0 %v790
      %868 = vmatmul.bf16.gmra.mxu0 %v622
      %v869 = vpop.f32.mrf.mxu0
      %v870 = vadd.f32 %v851, %v869
      %v871 = vpop.f32.mrf.mxu0
      %v872 = vadd.f32 %v853, %v871
      %873 = vmatmul.bf16.gmra.mxu0 %v625
      %v874 = vpop.f32.mrf.mxu0
      %v875 = vadd.f32 %v856, %v874
      %v876 = vpop.f32.mrf.mxu0
      %v877 = vadd.f32 %v858, %v876
      %878 = vdwg.mxu0
      %879 = vst [vmem:[%s314] sm:$0xff] %v870
      %880 = vst [vmem:[%s314 + $0x8] sm:$0xff] %v872
      %881 = vst [vmem:[%s314 + $0x10] sm:$0xff] %v875
      %882 = vst [vmem:[%s314 + $0x18] sm:$0xff] %v877
      %s883 = smul.u32 4, %s19
      %p884 = scmp.lt.s32.totalorder %s883, 7
      %s885 = scalar_select %p884, %s883, 7
      %s886 = smul.addr %s885, 8
      %s887 = scalar_lea.vmem %s6, %s886
      %s888 = smul.u32 4, %s19
      %p889 = scmp.lt.s32.totalorder %s888, 7
      %s890 = scalar_select %p889, %s888, 7
      %s891 = smul.addr %s890, 3
      %s892 = smul.addr %s891, 8
      %s893 = scalar_lea.vmem %s7, %s892
      // Predicated region
      $region45: #{feedforward_with_compression_state.1} parent=43 // pred_check
        %p894 = pneg %p173
      $region46: #{feedforward_with_compression_state.1} parent=43 // pred_check_branch
        %896 = sbr.rel (%p894) target = $region48
      $region47: #{feedforward_with_compression_state.1} parent=43 // pred_region
        %s897 = smul.u32 4, %s19
      $region48: #{feedforward_with_compression_state.1} parent=43 // pred_fallthru
        _
      // Predicated region
      $region49: #{feedforward_with_compression_state.1} parent=43 // pred_check
        %p898 = pneg %p199
      $region50: #{feedforward_with_compression_state.1} parent=43 // pred_check_branch
        %900 = sbr.rel (%p898) target = $region52
      $region51: #{feedforward_with_compression_state.1} parent=43 // pred_region
        %s901 = smul.u32 4, %s19
      $region52: #{feedforward_with_compression_state.1} parent=43 // pred_fallthru
        _
    $region44: #{feedforward_with_compression_state.1} parent=5 // pred_fallthru
      _
    %p902 = scmp.le.s32.totalorder 2, %s14
    // Predicated region
    $region53: #{feedforward_with_compression_state.1} parent=5 // pred_check
      %p903 = pneg %p902
    $region54: #{feedforward_with_compression_state.1} parent=5 // pred_check_branch
      %905 = sbr.rel (%p903) target = $region56
    $region55: #{feedforward_with_compression_state.1} parent=5 // pred_region
      %s906 = ssub.s32 %s14, 2
      // Predicated region
      $region57: #{feedforward_with_compression_state.1} parent=55 // pred_check
        %p907 = pneg %p179
      $region58: #{feedforward_with_compression_state.1} parent=55 // pred_check_branch
        %909 = sbr.rel (%p907) target = $region60
      $region59: #{feedforward_with_compression_state.1} parent=55 // pred_region
        %s910 = smul.u32 4, %s20
        %p911 = scmp.lt.s32.totalorder %s910, 7
        %s912 = scalar_select %p911, %s910, 7
        %s913 = smul.addr %s912, 8
        %s914 = scalar_lea.vmem %s6, %s913
      $region60: #{feedforward_with_compression_state.1} parent=55 // pred_fallthru
        _
      // Predicated region
      $region61: #{feedforward_with_compression_state.1} parent=55 // pred_check
        %p915 = pneg %p205
      $region62: #{feedforward_with_compression_state.1} parent=55 // pred_check_branch
        %917 = sbr.rel (%p915) target = $region64
      $region63: #{feedforward_with_compression_state.1} parent=55 // pred_region
        %s918 = smul.u32 4, %s20
        %p919 = scmp.lt.s32.totalorder %s918, 7
        %s920 = scalar_select %p919, %s918, 7
        %s921 = smul.addr %s920, 3
        %s922 = smul.addr %s921, 8
        %s923 = scalar_lea.vmem %s7, %s922
      $region64: #{feedforward_with_compression_state.1} parent=55 // pred_fallthru
        _
    $region56: #{feedforward_with_compression_state.1} parent=5 // pred_fallthru
      _
  $region6: #{feedforward_with_compression_state.1} parent=0 // loop_footer
    %s18 = sadd.s32 1, %s14
  $region7: #{feedforward_with_compression_state.1} parent=0 // loop_footer_branch
    %13 = sbr.rel target = $region3
  $region8: #{feedforward_with_compression_state.1} parent=0 // loop_exit
    _

</llo_original>
